<compile_context>
chip_gen: v7x
topology: tpu7x:2x2x1
jax: 0.10.0
libtpu: 0.0.40
codegen_flags: <defaults>
</compile_context>

<pallas_src>
import jax
import jax.numpy as jnp
import numpy as np
from jax.experimental import pallas as pl
from jax.experimental.pallas import tpu as pltpu


# ----------------------------------------------------------------------------- kernel

def _shortcut_kernel(xs_ref, w_ref, shift_ref, o_ref):
    """ReLU + (both 1x1 convs as one block-diagonal matmul) + folded-BN shift.

    xs_ref   : (2*Cin, TS)  bf16 stacked [branch1 ; branch2]; lanes = tile of N*H1*W1
    w_ref    : (Cout, 2*Cin) f32 block-diagonal conv weights with the BN scale folded in
    shift_ref: (Cout, 1)     f32 folded BN shift (beta - scale*mean)
    o_ref    : (Cout, TS)    bf16 lane-dense output tile
    """
    # Upcast + fused ReLU on the VPU (portable to v5e which lacks native bf16 VALU).
    h = jnp.maximum(xs_ref[...].astype(jnp.float32), 0.0)
    # Both 1x1 convs + channel concat as ONE MXU matmul (f32 accumulate).
    # TODO(synk): for 2*Cin > 128 split into two dots to skip the zero K-blocks.
    y = jnp.dot(w_ref[...], h, preferred_element_type=jnp.float32)     # (Cout, TS)
    o_ref[...] = (y + shift_ref[...]).astype(o_ref.dtype)              # BN shift, bf16 store


# ----------------------------------------------------------------------------- wrapper

def shortcut_forward(x_nchw, params, stride, eps=1e-5, lane_tile=2048):
    """Shortcut forward. Input NCHW -> output (N, Cout, H1, W1) in bfloat16."""
    N, Cin, H, W = x_nchw.shape
    w1 = params["conv1_w"].astype(jnp.float32).reshape(-1, Cin)        # (Cout//2, Cin)
    w2 = params["conv2_w"].astype(jnp.float32).reshape(-1, Cin)
    half = w1.shape[0]
    Cout = 2 * half

    H1 = (H - 1) // stride + 1                  # avg_pool2d(kernel=1, stride) output size
    W1 = (W - 1) // stride + 1
    S = H1 * W1
    L0 = N * S                                  # total lane extent before padding

    # ---- branch inputs (zero-FLOP layout plumbing; ReLU is applied in-kernel and
    #      commutes with decimation / zero edge-fill since relu(0)=0) ----
    x = x_nchw
    x1 = x[:, :, ::stride, ::stride]            # branch 1: plain decimation
    x2v = x[:, :, 1::stride, 1::stride]         # branch 2: (+1,+1)-shifted decimation ...
    x2 = jnp.pad(x2v, ((0, 0), (0, 0),
                       (0, H1 - x2v.shape[2]),  # ... zero-filled at bottom/right edge
                       (0, W1 - x2v.shape[3])))
    xs = jnp.concatenate([x1, x2], axis=1).reshape(N, 2 * Cin, S)
    # lane-dense layout: channels on sublanes, N*S on lanes, activations in bf16
    xs = xs.transpose(1, 0, 2).reshape(2 * Cin, L0).astype(jnp.bfloat16)

    # lane tile: multiple of 128, capped by lane_tile; pad lanes with zeros (harmless)
    TS = min(lane_tile, pl.cdiv(L0, 128) * 128)
    L = pl.cdiv(L0, TS) * TS
    if L != L0:
        xs = jnp.pad(xs, ((0, 0), (0, L - L0)))

    # ---- fold eval-mode BN into the bias-free 1x1 conv weights (free at trace time) ----
    scale = params["bn_gamma"].astype(jnp.float32) / jnp.sqrt(
        params["bn_var"].astype(jnp.float32) + eps)                          # (Cout,)
    shift = (params["bn_beta"].astype(jnp.float32)
             - scale * params["bn_mean"].astype(jnp.float32)).reshape(Cout, 1)
    # block-diagonal weight: cat(conv1(h1), conv2(h2)) becomes ONE matmul
    w_bd = jnp.zeros((Cout, 2 * Cin), jnp.float32)
    w_bd = w_bd.at[:half, :Cin].set(w1 * scale[:half, None])
    w_bd = w_bd.at[half:, Cin:].set(w2 * scale[half:, None])

    flops = 2 * Cout * (2 * Cin) * L
    bytes_accessed = (2 * Cin * L * 2          # xs (bf16)
                      + Cout * 2 * Cin * 4     # w_bd (f32)
                      + Cout * 4               # shift (f32)
                      + Cout * L * 2)          # output (bf16)

    grid = (L // TS,)
    out2d = pl.pallas_call(
        _shortcut_kernel,
        out_shape=jax.ShapeDtypeStruct((Cout, L), jnp.bfloat16),
        grid=grid,
        in_specs=[
            pl.BlockSpec((2 * Cin, TS), lambda t: (0, t)),       # activation tile
            pl.BlockSpec((Cout, 2 * Cin), lambda t: (0, 0)),     # VMEM-resident weight
            pl.BlockSpec((Cout, 1), lambda t: (0, 0)),           # VMEM-resident shift
        ],
        out_specs=pl.BlockSpec((Cout, TS), lambda t: (0, t)),
        compiler_params=pltpu.CompilerParams(
            dimension_semantics=("parallel",),
            vmem_limit_bytes=32 * 1024 * 1024),
        cost_estimate=pl.CostEstimate(flops=flops, transcendentals=0,
                                      bytes_accessed=bytes_accessed),
    )(xs, w_bd, shift)

    # strip lane padding, restore (N, Cout, H1, W1)
    out = out2d[:, :L0].reshape(Cout, N, S).transpose(1, 0, 2)
    return out.reshape(N, Cout, H1, W1)


# ----------------------------------------------------------------------------- reference (pure JAX)

def _ref_forward(x_nchw, params, stride, eps=1e-5):
    """Pure-JAX (f32) mirror of the PyTorch Shortcut.forward (eval-mode BN)."""
    x = x_nchw.astype(jnp.float32)
    h = jnp.maximum(x, 0.0)

    def conv1x1(inp, w_oihw):
        return jax.lax.conv_general_dilated(
            inp, w_oihw, window_strides=(1, 1), padding="VALID",
            dimension_numbers=("NCHW", "OIHW", "NCHW"))

    h1 = h[:, :, ::stride, ::stride]                                    # avg_pool2d(h, 1, stride)
    hp = jnp.pad(h[:, :, 1:, 1:], ((0, 0), (0, 0), (0, 1), (0, 1)))     # F.pad(h, (-1, 1, -1, 1))
    h2 = hp[:, :, ::stride, ::stride]

    y = jnp.concatenate([conv1x1(h1, params["conv1_w"]),
                         conv1x1(h2, params["conv2_w"])], axis=1)

    g = params["bn_gamma"].reshape(1, -1, 1, 1)
    b = params["bn_beta"].reshape(1, -1, 1, 1)
    m = params["bn_mean"].reshape(1, -1, 1, 1)
    v = params["bn_var"].reshape(1, -1, 1, 1)
    return g * (y - m) / jnp.sqrt(v + eps) + b


# ----------------------------------------------------------------------------- main

if __name__ == "__main__":
    N, Cin, H, W = 2, 8, 16, 16
    Cout, stride = 16, 2                 # Shortcut(in_ch=8, out_ch=16, stride=2)
    key = jax.random.PRNGKey(0)
    ks = jax.random.split(key, 7)

    params = {
        "conv1_w": jax.random.normal(ks[0], (Cout // 2, Cin, 1, 1), jnp.float32) * 0.1,
        "conv2_w": jax.random.normal(ks[1], (Cout // 2, Cin, 1, 1), jnp.float32) * 0.1,
        "bn_gamma": 1.0 + 0.1 * jax.random.normal(ks[2], (Cout,), jnp.float32),
        "bn_beta": 0.1 * jax.random.normal(ks[3], (Cout,), jnp.float32),
        "bn_mean": 0.05 * jax.random.normal(ks[4], (Cout,), jnp.float32),
        "bn_var": 0.5 + jax.random.uniform(ks[5], (Cout,), jnp.float32),
    }
    x = jax.random.normal(ks[6], (N, Cin, H, W), jnp.float32)

    # stride=2 (the usual downsampling configuration)
    out = jax.block_until_ready(shortcut_forward(x, params, stride))
    ref = jax.block_until_ready(_ref_forward(x, params, stride))
    np.testing.assert_allclose(np.asarray(out.astype(jnp.float32)), np.asarray(ref),
                               rtol=2e-2, atol=2e-2)   # bf16 activations/output path

    # stride=1 (exercises the zero-filled edge of the shifted branch)
    out1 = jax.block_until_ready(shortcut_forward(x, params, 1))
    ref1 = jax.block_until_ready(_ref_forward(x, params, 1))
    np.testing.assert_allclose(np.asarray(out1.astype(jnp.float32)), np.asarray(ref1),
                               rtol=2e-2, atol=2e-2)

    print("KERNEL_OK")
</pallas_src>

<mosaic_0001>
module attributes {stable_mosaic.version = 11 : i64} {
  func.func @_shortcut_kernel(%arg0: i32, %arg1: memref<16x128xbf16, #tpu.memory_space<vmem>>, %arg2: memref<16x16xf32, #tpu.memory_space<vmem>>, %arg3: memref<16x1xf32, #tpu.memory_space<vmem>>, %arg4: memref<16x128xbf16, #tpu.memory_space<vmem>>) attributes {dimension_semantics = [#tpu.dimension_semantics<parallel>], iteration_bounds = array<i64: 1>, scalar_prefetch = 0 : i64, scratch_operands = 0 : i64, tpu.core_type = #tpu.core_type<tc>, window_params = [{transform_indices = @transform_0, window_bounds = array<i64: 16, 128>}, {pipeline_mode = #tpu.pipeline_mode<synchronous>, transform_indices = @transform_1, window_bounds = array<i64: 16, 16>}, {pipeline_mode = #tpu.pipeline_mode<synchronous>, transform_indices = @transform_2, window_bounds = array<i64: 16, 1>}, {transform_indices = @transform_3, window_bounds = array<i64: 16, 128>}]} {
    %c0 = arith.constant 0 : index
    %c0_0 = arith.constant 0 : index
    %0 = vector.load %arg1[%c0, %c0_0] : memref<16x128xbf16, #tpu.memory_space<vmem>>, vector<16x128xbf16>
    %1 = arith.extf %0 : vector<16x128xbf16> to vector<16x128xf32>
    %cst = arith.constant 0.000000e+00 : f32
    %2 = vector.broadcast %cst : f32 to vector<16x128xf32>
    %3 = arith.maximumf %1, %2 : vector<16x128xf32>
    %c0_1 = arith.constant 0 : index
    %c0_2 = arith.constant 0 : index
    %4 = vector.load %arg2[%c0_1, %c0_2] : memref<16x16xf32, #tpu.memory_space<vmem>>, vector<16x16xf32>
    %cst_3 = arith.constant dense<0.000000e+00> : vector<16x128xf32>
    %5 = tpu.matmul %4, %3, %cst_3 {dimension_numbers = #tpu.dot_dimension_numbers<[1], [0], [0], [1], [0, 0, 1, 1], [], []>} : vector<16x16xf32>, vector<16x128xf32>, vector<16x128xf32> -> vector<16x128xf32>
    %c0_4 = arith.constant 0 : index
    %c0_5 = arith.constant 0 : index
    %6 = vector.load %arg3[%c0_4, %c0_5] : memref<16x1xf32, #tpu.memory_space<vmem>>, vector<16x1xf32>
    %7 = vector.broadcast %6 : vector<16x1xf32> to vector<16x128xf32>
    %8 = arith.addf %5, %7 : vector<16x128xf32>
    %9 = arith.truncf %8 : vector<16x128xf32> to vector<16x128xbf16>
    %c0_6 = arith.constant 0 : index
    %c0_7 = arith.constant 0 : index
    %10 = vector.load %arg4[%c0_6, %c0_7] : memref<16x128xbf16, #tpu.memory_space<vmem>>, vector<16x128xbf16>
    tpu.vector_store %arg4[%c0_6, %c0_7], %9 {strides = array<i32>} : memref<16x128xbf16, #tpu.memory_space<vmem>>, vector<16x128xbf16>,
    return
  }
  func.func @transform_0(%arg0: i32) -> (i32, i32) {
    %c0_i32 = arith.constant 0 : i32
    %c0_i32_0 = arith.constant 0 : i32
    return %c0_i32, %arg0 : i32, i32
  }
  func.func @transform_1(%arg0: i32) -> (i32, i32) {
    %c0_i32 = arith.constant 0 : i32
    %c0_i32_0 = arith.constant 0 : i32
    %c0_i32_1 = arith.constant 0 : i32
    return %c0_i32, %c0_i32_0 : i32, i32
  }
  func.func @transform_2(%arg0: i32) -> (i32, i32) {
    %c0_i32 = arith.constant 0 : i32
    %c0_i32_0 = arith.constant 0 : i32
    %c0_i32_1 = arith.constant 0 : i32
    return %c0_i32, %c0_i32_0 : i32, i32
  }
  func.func @transform_3(%arg0: i32) -> (i32, i32) {
    %c0_i32 = arith.constant 0 : i32
    %c0_i32_0 = arith.constant 0 : i32
    return %c0_i32, %arg0 : i32, i32
  }
}

</mosaic_0001>

<llo_original>
// kernel: tpu_custom_call.1
$region0: #{tpu_custom_call.1}
  #allocation0 [shape = 'u32[]', space=smem, size = 0x4, offset = 0x4, fixed_abs, tag = 'smem constant byte address 0x4 - core index']
  #allocation1 [shape = 'u32[144,128]{1,0:T(1,128)}', space=vmem, size = 0x12000, scoped, tag = 'internal scratch']
  %s0 = inlined_call_operand.hbm [shape: bf16[16,128], index: 0, kind: input, shape index: {}]
  %s1 = inlined_call_operand.vmem [shape: f32[16,16], index: 1, kind: input, shape index: {}]
  %s2 = inlined_call_operand.vmem [shape: f32[16,1], index: 2, kind: input, shape index: {}]
  %s3 = inlined_call_operand.hbm [shape: bf16[16,128], index: 3, kind: output, shape index: {}]
  %s4 = sld [smem:[#allocation0]]
  $region26: #{tpu_custom_call.1} parent=0
    _
  %s6 = ssub.s32 1, %s4
  %s7 = scalar_select 0, %s6, %s4
  $region1: #{tpu_custom_call.1} parent=0
    #allocation2 [shape = 'u8[4096]{0}', space=vmem, size = 0x1000, scoped, tag = 'input window, operand 0, single buffered']
    #allocation3 [shape = 's32[1]{0}', space=sflag, size = 0x4, scoped, tag = 'scoped memory for tpu_custom_call.1']
    #allocation4 [shape = 's32[1]{0}', space=sflag, size = 0x4, scoped, tag = 'scoped memory for tpu_custom_call.1']
    #allocation5 [shape = 'u8[4096]{0}', space=vmem, size = 0x1000, scoped, tag = 'output window, operand 0, single buffered']
    %8 = vsyncpa [#allocation3], 0
    %9 = vsyncpa [#allocation4], 0
    // Predicated region
    $region2: #{tpu_custom_call.1} parent=1 // pred_check
      _
    $region3: #{tpu_custom_call.1} parent=1 // pred_check_branch
      %11 = sbr.rel (0) target = $region5
    $region4: #{tpu_custom_call.1} parent=1 // pred_region
      %s13 = ssub.s32 128, 128
      %14 = vsyncadd [#allocation3], %s13
      %s15 = sshll.u32 [#allocation2], 4
      %s16 = int_to_ptr.vmem [resolvable:$true] %s15
      %21 = dma.hbm_to_vmem [thread:$0]  %s0, 128, %s16, [#allocation3], 64, 64, 4
    $region5: #{tpu_custom_call.1} parent=1 // pred_fallthru
      _
    // Predicated region
    $region6: #{tpu_custom_call.1} parent=1 // pred_check
      _
    $region7: #{tpu_custom_call.1} parent=1 // pred_check_branch
      %23 = sbr.rel (0) target = $region9
    $region8: #{tpu_custom_call.1} parent=1 // pred_region
      _
    $region9: #{tpu_custom_call.1} parent=1 // pred_fallthru
      _
    // Predicated region
    $region10: #{tpu_custom_call.1} parent=1 // pred_check
      _
    $region11: #{tpu_custom_call.1} parent=1 // pred_check_branch
      %25 = sbr.rel (0) target = $region13
    $region12: #{tpu_custom_call.1} parent=1 // pred_region
      _
    $region13: #{tpu_custom_call.1} parent=1 // pred_fallthru
      _
    // Predicated region
    $region14: #{tpu_custom_call.1} parent=1 // pred_check
      _
    $region15: #{tpu_custom_call.1} parent=1 // pred_check_branch
      %27 = sbr.rel (0) target = $region17
    $region16: #{tpu_custom_call.1} parent=1 // pred_region
      %28 = dma.done [#allocation3], 128
    $region17: #{tpu_custom_call.1} parent=1 // pred_fallthru
      _
    %v29 = vld [vmem:[#allocation2] sm:$0xf]
    %v30 = vld [vmem:[#allocation2 + $0x4] sm:$0xf]
    %v31 = vunpack.c.l.bf16 %v29
    %v32 = vunpack.c.l.bf16 %v30
    %v33 = vmax.f32 %v31, 0.0
    %v34 = vmax.f32 %v32, 0.0
    %v35 = vld [vmem:[%s1] sm:$0xff]
    %v36 = vld [vmem:[%s1 + $0x8] sm:$0xff]
    %v37 = vld [vmem:[%s2] sm:$0xff]
    %v38 = vld [vmem:[%s2 + $0x8] sm:$0xff]
    %40 = vset.pattern.permute.xlu0 0
    %41 = vperm.xlu0 %40, %v37
    %v42 = vpop.permute.xlu0 %41
    %45 = vset.pattern.permute.xlu0 0
    %46 = vperm.xlu0 %45, %v38
    %v47 = vpop.permute.xlu0 %46
    %vm49 = vcmask 130048
    %v51 = vsel %vm49, %v35, 0
    %v54 = vsel %vm49, %v36, 0
    %56 = vmatprep.subr.mxu0 0.0
    %57 = vmatpush1.msra.mxu0 %v33
    %58 = vmatprep.subr.mxu0 0.0
    %59 = vmatpush1.msra.mxu0 %v34
    %60 = vmatprep.subr.mxu0 0.0
    %61 = vmatpush1.msra.mxu0 0.0
    %62 = vmatprep.subr.mxu0 0.0
    %63 = vmatpush1.msra.mxu0 0.0
    %64 = vmatprep.subr.mxu0 0.0
    %65 = vmatpush1.msra.mxu0 0.0
    %66 = vmatprep.subr.mxu0 0.0
    %67 = vmatpush1.msra.mxu0 0.0
    %68 = vmatprep.subr.mxu0 0.0
    %69 = vmatpush1.msra.mxu0 0.0
    %70 = vmatprep.subr.mxu0 0.0
    %71 = vmatpush1.msra.mxu0 0.0
    %72 = vmatprep.subr.mxu0 0.0
    %73 = vmatpush1.msra.mxu0 0.0
    %74 = vmatprep.subr.mxu0 0.0
    %75 = vmatpush1.msra.mxu0 0.0
    %76 = vmatprep.subr.mxu0 0.0
    %77 = vmatpush1.msra.mxu0 0.0
    %78 = vmatprep.subr.mxu0 0.0
    %79 = vmatpush1.msra.mxu0 0.0
    %80 = vmatprep.subr.mxu0 0.0
    %81 = vmatpush1.msra.mxu0 0.0
    %82 = vmatprep.subr.mxu0 0.0
    %83 = vmatpush1.msra.mxu0 0.0
    %84 = vmatprep.subr.mxu0 0.0
    %85 = vmatpush1.msra.mxu0 0.0
    %86 = vmatprep.subr.mxu0 0.0
    %87 = vmatpush1.msra.mxu0 0.0
    %88 = vmatprep.subr.mxu0 0.0
    %89 = vmatpush1.msra.mxu0 0.0
    %90 = vmatprep.subr.mxu0 0.0
    %91 = vmatpush1.msra.mxu0 0.0
    %92 = vmatprep.subr.mxu0 0.0
    %93 = vmatpush1.msra.mxu0 0.0
    %94 = vmatprep.subr.mxu0 0.0
    %95 = vmatpush1.msra.mxu0 0.0
    %96 = vmatprep.subr.mxu0 0.0
    %97 = vmatpush1.msra.mxu0 0.0
    %98 = vmatprep.subr.mxu0 0.0
    %99 = vmatpush1.msra.mxu0 0.0
    %100 = vmatprep.subr.mxu0 0.0
    %101 = vmatpush1.msra.mxu0 0.0
    %102 = vmatprep.subr.mxu0 0.0
    %103 = vmatpush1.msra.mxu0 0.0
    %104 = vmatprep.subr.mxu0 0.0
    %105 = vmatpush1.msra.mxu0 0.0
    %106 = vmatprep.subr.mxu0 0.0
    %107 = vmatpush1.msra.mxu0 0.0
    %108 = vmatprep.subr.mxu0 0.0
    %109 = vmatpush1.msra.mxu0 0.0
    %110 = vmatprep.subr.mxu0 0.0
    %111 = vmatpush1.msra.mxu0 0.0
    %112 = vmatprep.subr.mxu0 0.0
    %113 = vmatpush1.msra.mxu0 0.0
    %114 = vmatprep.subr.mxu0 0.0
    %115 = vmatpush1.msra.mxu0 0.0
    %116 = vmatprep.subr.mxu0 0.0
    %117 = vmatpush1.msra.mxu0 0.0
    %118 = vmatprep.subr.mxu0 0.0
    %119 = vmatpush1.msra.mxu0 0.0
    %120 = vmatprep.mubr.f32.mxu0 0.0
    %121 = vmatmul.mubr.f32.gmra.mrb[0].mxu0 %v51
    %v122 = vpop.f32.mrb[0].mxu0
    %v123 = vadd.f32 %v42, %v122
    %v124 = vpop.f32.mrb[0].mxu0
    %125 = vmatprep.mubr.f32.mxu0 0.0
    %126 = vmatmul.mubr.f32.gmra.mrb[0].mxu0 %v54
    %v127 = vpop.f32.mrb[0].mxu0
    %v128 = vadd.f32 %v47, %v127
    %v129 = vpop.f32.mrb[0].mxu0
    %130 = vdwg.mxu0
    %v131 = vpack.c.bf16 %v128, %v123
    %v133 = vunpack.c.l.b16 %v131
    %v134 = vunpack.c.h.b16 %v131
    %v135 = vpack.c.b16 %v133, %v133
    %v136 = vpack.c.b16 %v134, %v134
    %139 = vst [vmem:[#allocation5] sm:$0xf] %v135
    %140 = vst [vmem:[#allocation5 + $0x4] sm:$0xf] %v136
    // Predicated region
    $region18: #{tpu_custom_call.1} parent=1 // pred_check
      _
    $region19: #{tpu_custom_call.1} parent=1 // pred_check_branch
      %142 = sbr.rel (0) target = $region21
    $region20: #{tpu_custom_call.1} parent=1 // pred_region
      %s144 = ssub.s32 128, 128
      %145 = vsyncadd [#allocation4], %s144
      %s146 = sshll.u32 [#allocation5], 4
      %s147 = int_to_ptr.vmem [resolvable:$true] %s146
      %152 = dma.vmem_to_hbm [thread:$0]  %s147, 128, %s3, [#allocation4], 64, 64, 4
    $region21: #{tpu_custom_call.1} parent=1 // pred_fallthru
      _
    // Predicated region
    $region22: #{tpu_custom_call.1} parent=1 // pred_check
      _
    $region23: #{tpu_custom_call.1} parent=1 // pred_check_branch
      %154 = sbr.rel (0) target = $region25
    $region24: #{tpu_custom_call.1} parent=1 // pred_region
      %155 = dma.done [#allocation4], 128
    $region25: #{tpu_custom_call.1} parent=1 // pred_fallthru
      _
    %156 = vsyncpa [#allocation3], 1
    %157 = vsyncpa [#allocation4], 1

</llo_original>
